<compile_context>
chip_gen: v7x
topology: tpu7x:2x2x1
jax: 0.10.0
libtpu: 0.0.40
codegen_flags: <defaults>
</compile_context>

<pallas_src>
import math
import jax
import jax.numpy as jnp
from jax.experimental import pallas as pl
from jax.experimental.pallas import tpu as pltpu


def attention_kernel(enc_ref, dec_ref, w_enc_ref, w_dec_ref, b_dec_ref, w_att_ref,
                     ctx_ref, alpha_ref):
    ef = enc_ref[...]            # (B, N, E)
    dh = dec_ref[...]            # (B, D)
    B, N, E = ef.shape
    A = w_enc_ref.shape[1]

    # att1 = linear_enc(encoded_feats) for all (b, n) in one MXU issue: (B*N, E) @ (E, A)
    att1 = jnp.dot(ef.reshape(B * N, E), w_enc_ref[...],
                   preferred_element_type=jnp.float32).reshape(B, N, A)

    # att2 = linear_dec(decoder_hidden) for the whole batch: (B, D) @ (D, A) + bias
    att2 = jnp.dot(dh, w_dec_ref[...],
                   preferred_element_type=jnp.float32) + b_dec_ref[...]       # (B, A)

    # rs = relu(att1 + att2.unsqueeze(1))
    rs = jnp.maximum(att1 + att2[:, None, :], 0.0)                            # (B, N, A)

    # att = attention_layer(rs).squeeze(2)  -> lane-dense (B, N) row of scores
    att = jnp.sum(rs * w_att_ref[...], axis=-1)                               # (B, N)

    # softmax over the region axis (lane axis)
    m = jnp.max(att, axis=-1, keepdims=True)
    e = jnp.exp(att - m)
    alpha = e * pl.reciprocal(jnp.sum(e, axis=-1, keepdims=True), approx=True)  # (B, N)

    # context = sum_n alpha[b, n] * encoded_feats[b, n, :]  (batched MXU matmul)
    ctx = jnp.einsum('bqn,bne->bqe', alpha[:, None, :], ef,
                     preferred_element_type=jnp.float32)[:, 0, :]             # (B, E)

    ctx_ref[...] = ctx.astype(ctx_ref.dtype)
    alpha_ref[...] = alpha.astype(alpha_ref.dtype)


def attention_forward(encoded_feats, decoder_hidden, w_enc, w_dec, b_dec, w_att):
    """encoded_feats: (B, N, E), decoder_hidden: (B, D).
       w_enc: (E, A), w_dec: (D, A), b_dec: (1, A), w_att: (1, A) (row layout).
       Returns (context (B, E), alpha (B, N))."""
    B, N, E = encoded_feats.shape
    _, D = decoder_hidden.shape
    A = w_enc.shape[1]

    ctx, alpha = pl.pallas_call(
        attention_kernel,
        out_shape=(
            jax.ShapeDtypeStruct((B, E), encoded_feats.dtype),
            jax.ShapeDtypeStruct((B, N), encoded_feats.dtype),
        ),
        grid=(1,),
        in_specs=[
            pl.BlockSpec((B, N, E), lambda i: (0, 0, 0)),   # encoded_feats (whole batch)
            pl.BlockSpec((B, D), lambda i: (0, 0)),         # decoder_hidden (whole batch)
            pl.BlockSpec((E, A), lambda i: (0, 0)),         # W_enc (resident)
            pl.BlockSpec((D, A), lambda i: (0, 0)),         # W_dec (resident)
            pl.BlockSpec((1, A), lambda i: (0, 0)),         # b_dec (resident)
            pl.BlockSpec((1, A), lambda i: (0, 0)),         # W_att row (resident)
        ],
        out_specs=(
            pl.BlockSpec((B, E), lambda i: (0, 0)),         # context
            pl.BlockSpec((B, N), lambda i: (0, 0)),         # alpha (lane-dense row)
        ),
        compiler_params=pltpu.CompilerParams(
            dimension_semantics=("arbitrary",)),
    )(encoded_feats, decoder_hidden, w_enc, w_dec, b_dec, w_att)

    return ctx, alpha


def xavier_uniform(key, shape_out_in, dtype=jnp.float32):
    fan_out, fan_in = shape_out_in
    bound = math.sqrt(6.0 / (fan_in + fan_out))
    return jax.random.uniform(key, shape_out_in, dtype=dtype, minval=-bound, maxval=bound)


def reference_forward(encoded_feats, decoder_hidden, w_enc, w_dec, b_dec, w_att_row):
    att1 = encoded_feats @ w_enc                                   # (B, N, A)
    att2 = decoder_hidden @ w_dec + b_dec                          # (B, A)
    rs = jnp.maximum(att1 + att2[:, None, :], 0.0)                 # (B, N, A)
    att = jnp.sum(rs * w_att_row, axis=-1)                         # (B, N)
    alpha = jax.nn.softmax(att, axis=1)                            # (B, N)
    context = jnp.sum(encoded_feats * alpha[:, :, None], axis=1)   # (B, E)
    return context, alpha


if __name__ == "__main__":
    # config: hidden_size=32 (decoder_dim), attention_dim=32, embed_drop_rate=0.1
    B, N = 2, 8
    encoder_dim, decoder_dim, attention_dim = 32, 32, 32

    key = jax.random.PRNGKey(0)
    k_ef, k_dh, k_we, k_wd, k_wa = jax.random.split(key, 5)

    encoded_feats = jax.random.normal(k_ef, (B, N, encoder_dim), dtype=jnp.float32)
    decoder_hidden = jax.random.normal(k_dh, (B, decoder_dim), dtype=jnp.float32)

    # PyTorch Linear weights are (out, in); xavier init on that shape, then transpose
    # to (in, out) for right-multiplication in the kernel. w_att stays as a (1, A) row.
    w_enc = xavier_uniform(k_we, (attention_dim, encoder_dim)).T    # (E, A)
    w_dec = xavier_uniform(k_wd, (attention_dim, decoder_dim)).T    # (D, A)
    b_dec = jnp.zeros((1, attention_dim), dtype=jnp.float32)        # bias filled with 0
    w_att = xavier_uniform(k_wa, (1, attention_dim))                # (1, A)

    ctx, alpha = attention_forward(encoded_feats, decoder_hidden,
                                   w_enc, w_dec, b_dec, w_att)
    jax.block_until_ready((ctx, alpha))

    ctx_ref, alpha_ref = reference_forward(encoded_feats, decoder_hidden,
                                           w_enc, w_dec, b_dec, w_att)
    # Tolerances loosened vs. exact f32 to accommodate pl.reciprocal(approx=True).
    assert jnp.allclose(ctx, ctx_ref, atol=2e-3, rtol=2e-3)
    assert jnp.allclose(alpha, alpha_ref, atol=2e-3, rtol=2e-3)
    assert jnp.allclose(jnp.sum(alpha, axis=1), 1.0, atol=5e-3)

    print("KERNEL_OK")
</pallas_src>

<mosaic_0001>
module attributes {stable_mosaic.version = 11 : i64} {
  func.func @attention_kernel(%arg0: i32, %arg1: memref<2x8x32xf32, #tpu.memory_space<vmem>>, %arg2: memref<2x32xf32, #tpu.memory_space<vmem>>, %arg3: memref<32x32xf32, #tpu.memory_space<vmem>>, %arg4: memref<32x32xf32, #tpu.memory_space<vmem>>, %arg5: memref<1x32xf32, #tpu.memory_space<vmem>>, %arg6: memref<1x32xf32, #tpu.memory_space<vmem>>, %arg7: memref<2x32xf32, #tpu.memory_space<vmem>>, %arg8: memref<2x8xf32, #tpu.memory_space<vmem>>) attributes {dimension_semantics = [#tpu.dimension_semantics<arbitrary>], iteration_bounds = array<i64: 1>, scalar_prefetch = 0 : i64, scratch_operands = 0 : i64, tpu.core_type = #tpu.core_type<tc>, window_params = [{pipeline_mode = #tpu.pipeline_mode<synchronous>, transform_indices = @transform_0, window_bounds = array<i64: 2, 8, 32>}, {pipeline_mode = #tpu.pipeline_mode<synchronous>, transform_indices = @transform_1, window_bounds = array<i64: 2, 32>}, {pipeline_mode = #tpu.pipeline_mode<synchronous>, transform_indices = @transform_2, window_bounds = array<i64: 32, 32>}, {pipeline_mode = #tpu.pipeline_mode<synchronous>, transform_indices = @transform_3, window_bounds = array<i64: 32, 32>}, {pipeline_mode = #tpu.pipeline_mode<synchronous>, transform_indices = @transform_4, window_bounds = array<i64: 1, 32>}, {pipeline_mode = #tpu.pipeline_mode<synchronous>, transform_indices = @transform_5, window_bounds = array<i64: 1, 32>}, {pipeline_mode = #tpu.pipeline_mode<synchronous>, transform_indices = @transform_6, window_bounds = array<i64: 2, 32>}, {pipeline_mode = #tpu.pipeline_mode<synchronous>, transform_indices = @transform_7, window_bounds = array<i64: 2, 8>}]} {
    %c0 = arith.constant 0 : index
    %c0_0 = arith.constant 0 : index
    %c0_1 = arith.constant 0 : index
    %0 = vector.load %arg1[%c0, %c0_0, %c0_1] : memref<2x8x32xf32, #tpu.memory_space<vmem>>, vector<2x8x32xf32>
    %c0_2 = arith.constant 0 : index
    %c0_3 = arith.constant 0 : index
    %1 = vector.load %arg2[%c0_2, %c0_3] : memref<2x32xf32, #tpu.memory_space<vmem>>, vector<2x32xf32>
    %2 = vector.shape_cast %0 : vector<2x8x32xf32> to vector<16x32xf32>
    %c0_4 = arith.constant 0 : index
    %c0_5 = arith.constant 0 : index
    %3 = vector.load %arg3[%c0_4, %c0_5] : memref<32x32xf32, #tpu.memory_space<vmem>>, vector<32x32xf32>
    %cst = arith.constant dense<0.000000e+00> : vector<16x32xf32>
    %4 = tpu.matmul %2, %3, %cst {dimension_numbers = #tpu.dot_dimension_numbers<[1], [0], [0], [1], [0, 0, 1, 1], [], []>} : vector<16x32xf32>, vector<32x32xf32>, vector<16x32xf32> -> vector<16x32xf32>
    %5 = vector.shape_cast %4 : vector<16x32xf32> to vector<2x8x32xf32>
    %c0_6 = arith.constant 0 : index
    %c0_7 = arith.constant 0 : index
    %6 = vector.load %arg4[%c0_6, %c0_7] : memref<32x32xf32, #tpu.memory_space<vmem>>, vector<32x32xf32>
    %cst_8 = arith.constant dense<0.000000e+00> : vector<2x32xf32>
    %7 = tpu.matmul %1, %6, %cst_8 {dimension_numbers = #tpu.dot_dimension_numbers<[1], [0], [0], [1], [0, 0, 1, 1], [], []>} : vector<2x32xf32>, vector<32x32xf32>, vector<2x32xf32> -> vector<2x32xf32>
    %c0_9 = arith.constant 0 : index
    %c0_10 = arith.constant 0 : index
    %8 = vector.load %arg5[%c0_9, %c0_10] : memref<1x32xf32, #tpu.memory_space<vmem>>, vector<1x32xf32>
    %9 = vector.broadcast %8 : vector<1x32xf32> to vector<2x32xf32>
    %10 = arith.addf %7, %9 : vector<2x32xf32>
    %11 = vector.shape_cast %10 : vector<2x32xf32> to vector<2x1x32xf32>
    %12 = vector.broadcast %11 : vector<2x1x32xf32> to vector<2x8x32xf32>
    %13 = arith.addf %5, %12 : vector<2x8x32xf32>
    %cst_11 = arith.constant 0.000000e+00 : f32
    %14 = vector.broadcast %cst_11 : f32 to vector<2x8x32xf32>
    %15 = arith.maximumf %13, %14 : vector<2x8x32xf32>
    %c0_12 = arith.constant 0 : index
    %c0_13 = arith.constant 0 : index
    %16 = vector.load %arg6[%c0_12, %c0_13] : memref<1x32xf32, #tpu.memory_space<vmem>>, vector<1x32xf32>
    %17 = vector.shape_cast %16 : vector<1x32xf32> to vector<1x1x32xf32>
    %18 = vector.broadcast %17 : vector<1x1x32xf32> to vector<2x8x32xf32>
    %19 = arith.mulf %15, %18 : vector<2x8x32xf32>
    %cst_14 = arith.constant dense<0.000000e+00> : vector<2x8xf32>
    %20 = vector.multi_reduction <add>, %19, %cst_14 [2] : vector<2x8x32xf32> to vector<2x8xf32>
    %cst_15 = arith.constant dense<0xFF800000> : vector<2xf32>
    %21 = vector.multi_reduction <maximumf>, %20, %cst_15 [1] : vector<2x8xf32> to vector<2xf32>
    %22 = vector.shape_cast %21 : vector<2xf32> to vector<2x1xf32>
    %23 = vector.broadcast %22 : vector<2x1xf32> to vector<2x8xf32>
    %24 = arith.subf %20, %23 : vector<2x8xf32>
    %25 = math.exp %24 : vector<2x8xf32>
    %cst_16 = arith.constant dense<0.000000e+00> : vector<2xf32>
    %26 = vector.multi_reduction <add>, %25, %cst_16 [1] : vector<2x8xf32> to vector<2xf32>
    %27 = vector.shape_cast %26 : vector<2xf32> to vector<2x1xf32>
    %28 = tpu.reciprocal %27 {approx = true} : vector<2x1xf32> -> vector<2x1xf32>
    %29 = vector.broadcast %28 : vector<2x1xf32> to vector<2x8xf32>
    %30 = arith.mulf %25, %29 : vector<2x8xf32>
    %31 = vector.shape_cast %30 : vector<2x8xf32> to vector<2x1x8xf32>
    "tpu.trace_start"() <{level = 10 : i32, message = "bqn,bne->bqe"}> : () -> ()
    %cst_17 = arith.constant dense<0.000000e+00> : vector<2x1x32xf32>
    %32 = tpu.matmul %31, %0, %cst_17 {dimension_numbers = #tpu.dot_dimension_numbers<[2], [1], [1], [2], [0, 0, 0, 1, 1, 2], [0], [0]>} : vector<2x1x8xf32>, vector<2x8x32xf32>, vector<2x1x32xf32> -> vector<2x1x32xf32>
    "tpu.trace_stop"() : () -> ()
    %33 = vector.shape_cast %32 : vector<2x1x32xf32> to vector<2x32xf32>
    %c0_18 = arith.constant 0 : index
    %c0_19 = arith.constant 0 : index
    %34 = vector.load %arg7[%c0_18, %c0_19] : memref<2x32xf32, #tpu.memory_space<vmem>>, vector<2x32xf32>
    tpu.vector_store %arg7[%c0_18, %c0_19], %33 {strides = array<i32>} : memref<2x32xf32, #tpu.memory_space<vmem>>, vector<2x32xf32>,
    %c0_20 = arith.constant 0 : index
    %c0_21 = arith.constant 0 : index
    %35 = vector.load %arg8[%c0_20, %c0_21] : memref<2x8xf32, #tpu.memory_space<vmem>>, vector<2x8xf32>
    tpu.vector_store %arg8[%c0_20, %c0_21], %30 {strides = array<i32>} : memref<2x8xf32, #tpu.memory_space<vmem>>, vector<2x8xf32>,
    return
  }
  func.func @transform_0(%arg0: i32) -> (i32, i32, i32) {
    %c0_i32 = arith.constant 0 : i32
    %c0_i32_0 = arith.constant 0 : i32
    %c0_i32_1 = arith.constant 0 : i32
    %c0_i32_2 = arith.constant 0 : i32
    return %c0_i32, %c0_i32_0, %c0_i32_1 : i32, i32, i32
  }
  func.func @transform_1(%arg0: i32) -> (i32, i32) {
    %c0_i32 = arith.constant 0 : i32
    %c0_i32_0 = arith.constant 0 : i32
    %c0_i32_1 = arith.constant 0 : i32
    return %c0_i32, %c0_i32_0 : i32, i32
  }
  func.func @transform_2(%arg0: i32) -> (i32, i32) {
    %c0_i32 = arith.constant 0 : i32
    %c0_i32_0 = arith.constant 0 : i32
    %c0_i32_1 = arith.constant 0 : i32
    return %c0_i32, %c0_i32_0 : i32, i32
  }
  func.func @transform_3(%arg0: i32) -> (i32, i32) {
    %c0_i32 = arith.constant 0 : i32
    %c0_i32_0 = arith.constant 0 : i32
    %c0_i32_1 = arith.constant 0 : i32
    return %c0_i32, %c0_i32_0 : i32, i32
  }
  func.func @transform_4(%arg0: i32) -> (i32, i32) {
    %c0_i32 = arith.constant 0 : i32
    %c0_i32_0 = arith.constant 0 : i32
    %c0_i32_1 = arith.constant 0 : i32
    return %c0_i32, %c0_i32_0 : i32, i32
  }
  func.func @transform_5(%arg0: i32) -> (i32, i32) {
    %c0_i32 = arith.constant 0 : i32
    %c0_i32_0 = arith.constant 0 : i32
    %c0_i32_1 = arith.constant 0 : i32
    return %c0_i32, %c0_i32_0 : i32, i32
  }
  func.func @transform_6(%arg0: i32) -> (i32, i32) {
    %c0_i32 = arith.constant 0 : i32
    %c0_i32_0 = arith.constant 0 : i32
    %c0_i32_1 = arith.constant 0 : i32
    return %c0_i32, %c0_i32_0 : i32, i32
  }
  func.func @transform_7(%arg0: i32) -> (i32, i32) {
    %c0_i32 = arith.constant 0 : i32
    %c0_i32_0 = arith.constant 0 : i32
    %c0_i32_1 = arith.constant 0 : i32
    return %c0_i32, %c0_i32_0 : i32, i32
  }
}

</mosaic_0001>

<llo_original>
// kernel: tpu_custom_call.1
$region0: #{tpu_custom_call.1}
  #allocation0 [shape = 'u32[]', space=smem, size = 0x4, offset = 0x4, fixed_abs, tag = 'smem constant byte address 0x4 - core index']
  #allocation1 [shape = 'u32[144,128]{1,0:T(1,128)}', space=vmem, size = 0x12000, scoped, tag = 'internal scratch']
  %s0 = inlined_call_operand.hbm [shape: f32[2,8,32], index: 0, kind: input, shape index: {}]
  %s1 = inlined_call_operand.vmem [shape: f32[2,32], index: 1, kind: input, shape index: {}]
  %s2 = inlined_call_operand.hbm [shape: f32[32,32], index: 2, kind: input, shape index: {}]
  %s3 = inlined_call_operand.hbm [shape: f32[32,32], index: 3, kind: input, shape index: {}]
  %s4 = inlined_call_operand.vmem [shape: f32[1,32], index: 4, kind: input, shape index: {}]
  %s5 = inlined_call_operand.vmem [shape: f32[1,32], index: 5, kind: input, shape index: {}]
  %s6 = inlined_call_operand.hbm [shape: f32[2,32], index: 6, kind: output, shape index: {0}]
  %s7 = inlined_call_operand.hbm [shape: f32[2,8], index: 7, kind: output, shape index: {1}]
  %8 = xla_tuple %s6, %s7
  %s9 = sld [smem:[#allocation0]]
  $region54: #{tpu_custom_call.1} parent=0
    _
  %s11 = ssub.s32 1, %s9
  %s12 = scalar_select 0, %s11, %s9
  $region1: #{tpu_custom_call.1} parent=0
    #allocation2 [shape = 'u8[8192]{0}', space=vmem, size = 0x2000, scoped, tag = 'input window, operand 0, single buffered']
    #allocation3 [shape = 's32[1]{0}', space=sflag, size = 0x4, scoped, tag = 'scoped memory for tpu_custom_call.1']
    #allocation4 [shape = 's32[1]{0}', space=sflag, size = 0x4, scoped, tag = 'scoped memory for tpu_custom_call.1']
    #allocation5 [shape = 'u8[16384]{0}', space=vmem, size = 0x4000, scoped, tag = 'input window, operand 2, single buffered']
    #allocation6 [shape = 's32[1]{0}', space=sflag, size = 0x4, scoped, tag = 'scoped memory for tpu_custom_call.1']
    #allocation7 [shape = 'u8[16384]{0}', space=vmem, size = 0x4000, scoped, tag = 'input window, operand 3, single buffered']
    #allocation8 [shape = 'u8[1024]{0}', space=vmem, size = 0x400, scoped, tag = 'output window, operand 0, single buffered']
    #allocation9 [shape = 'u8[1024]{0}', space=vmem, size = 0x400, scoped, tag = 'output window, operand 1, single buffered']
    #allocation10 [shape = 's32[1]{0}', space=sflag, size = 0x4, scoped, tag = 'scoped memory for tpu_custom_call.1']
    %13 = vsyncpa [#allocation3], 0
    %14 = vsyncpa [#allocation6], 0
    %15 = vsyncpa [#allocation4], 0
    %16 = vsyncpa [#allocation10], 0
    // Predicated region
    $region2: #{tpu_custom_call.1} parent=1 // pred_check
      _
    $region3: #{tpu_custom_call.1} parent=1 // pred_check_branch
      %18 = sbr.rel (0) target = $region5
    $region4: #{tpu_custom_call.1} parent=1 // pred_region
      %s20 = ssub.s32 256, 256
      %21 = vsyncadd [#allocation3], %s20
      %s22 = sshll.u32 [#allocation2], 4
      %s23 = int_to_ptr.vmem [resolvable:$true] %s22
      %28 = dma.hbm_to_vmem [thread:$0]  %s0, 256, %s23, [#allocation3], 128, 128, 8
    $region5: #{tpu_custom_call.1} parent=1 // pred_fallthru
      _
    // Predicated region
    $region6: #{tpu_custom_call.1} parent=1 // pred_check
      _
    $region7: #{tpu_custom_call.1} parent=1 // pred_check_branch
      %30 = sbr.rel (0) target = $region9
    $region8: #{tpu_custom_call.1} parent=1 // pred_region
      _
    $region9: #{tpu_custom_call.1} parent=1 // pred_fallthru
      _
    // Predicated region
    $region10: #{tpu_custom_call.1} parent=1 // pred_check
      _
    $region11: #{tpu_custom_call.1} parent=1 // pred_check_branch
      %32 = sbr.rel (0) target = $region13
    $region12: #{tpu_custom_call.1} parent=1 // pred_region
      %s34 = ssub.s32 512, 512
      %35 = vsyncadd [#allocation6], %s34
      %s36 = sshll.u32 [#allocation5], 4
      %s37 = int_to_ptr.vmem [resolvable:$true] %s36
      %42 = dma.hbm_to_vmem [thread:$0]  %s2, 512, %s37, [#allocation6], 128, 128, 8
    $region13: #{tpu_custom_call.1} parent=1 // pred_fallthru
      _
    // Predicated region
    $region14: #{tpu_custom_call.1} parent=1 // pred_check
      _
    $region15: #{tpu_custom_call.1} parent=1 // pred_check_branch
      %44 = sbr.rel (0) target = $region17
    $region16: #{tpu_custom_call.1} parent=1 // pred_region
      %s46 = ssub.s32 512, 512
      %47 = vsyncadd [#allocation6], %s46
      %s48 = sshll.u32 [#allocation7], 4
      %s49 = int_to_ptr.vmem [resolvable:$true] %s48
      %54 = dma.hbm_to_vmem [thread:$0]  %s3, 512, %s49, [#allocation6], 128, 128, 8
    $region17: #{tpu_custom_call.1} parent=1 // pred_fallthru
      _
    // Predicated region
    $region18: #{tpu_custom_call.1} parent=1 // pred_check
      _
    $region19: #{tpu_custom_call.1} parent=1 // pred_check_branch
      %56 = sbr.rel (0) target = $region21
    $region20: #{tpu_custom_call.1} parent=1 // pred_region
      _
    $region21: #{tpu_custom_call.1} parent=1 // pred_fallthru
      _
    // Predicated region
    $region22: #{tpu_custom_call.1} parent=1 // pred_check
      _
    $region23: #{tpu_custom_call.1} parent=1 // pred_check_branch
      %58 = sbr.rel (0) target = $region25
    $region24: #{tpu_custom_call.1} parent=1 // pred_region
      _
    $region25: #{tpu_custom_call.1} parent=1 // pred_fallthru
      _
    // Predicated region
    $region26: #{tpu_custom_call.1} parent=1 // pred_check
      _
    $region27: #{tpu_custom_call.1} parent=1 // pred_check_branch
      %60 = sbr.rel (0) target = $region29
    $region28: #{tpu_custom_call.1} parent=1 // pred_region
      %61 = dma.done [#allocation3], 256
    $region29: #{tpu_custom_call.1} parent=1 // pred_fallthru
      _
    // Predicated region
    $region30: #{tpu_custom_call.1} parent=1 // pred_check
      _
    $region31: #{tpu_custom_call.1} parent=1 // pred_check_branch
      %63 = sbr.rel (0) target = $region33
    $region32: #{tpu_custom_call.1} parent=1 // pred_region
      %64 = dma.done [#allocation6], 512
    $region33: #{tpu_custom_call.1} parent=1 // pred_fallthru
      _
    // Predicated region
    $region34: #{tpu_custom_call.1} parent=1 // pred_check
      _
    $region35: #{tpu_custom_call.1} parent=1 // pred_check_branch
      %66 = sbr.rel (0) target = $region37
    $region36: #{tpu_custom_call.1} parent=1 // pred_region
      %67 = dma.done [#allocation6], 512
    $region37: #{tpu_custom_call.1} parent=1 // pred_fallthru
      _
    %v68 = vld [vmem:[#allocation2] sm:$0xff]
    %v69 = vld [vmem:[#allocation2 + $0x8] sm:$0xff]
    %v70 = vld [vmem:[%s1] sm:$0x3]
    %v71 = vld [vmem:[#allocation5] sm:$0xff]
    %v72 = vld [vmem:[#allocation5 + $0x8] sm:$0xff]
    %v73 = vld [vmem:[#allocation5 + $0x10] sm:$0xff]
    %v74 = vld [vmem:[#allocation5 + $0x18] sm:$0xff]
    %vm75 = vcmask 261120
    %v77 = vsel %vm75, %v68, 0
    %v80 = vsel %vm75, %v69, 0
    %82 = vmatprep.subr.mxu0 0.0
    %83 = vmatpush1.msra.mxu0 %v71
    %84 = vmatprep.subr.mxu0 0.0
    %85 = vmatpush1.msra.mxu0 %v72
    %86 = vmatprep.subr.mxu0 0.0
    %87 = vmatpush1.msra.mxu0 %v73
    %88 = vmatprep.subr.mxu0 0.0
    %89 = vmatpush1.msra.mxu0 %v74
    %90 = vmatprep.subr.mxu0 0.0
    %91 = vmatpush1.msra.mxu0 0.0
    %92 = vmatprep.subr.mxu0 0.0
    %93 = vmatpush1.msra.mxu0 0.0
    %94 = vmatprep.subr.mxu0 0.0
    %95 = vmatpush1.msra.mxu0 0.0
    %96 = vmatprep.subr.mxu0 0.0
    %97 = vmatpush1.msra.mxu0 0.0
    %98 = vmatprep.subr.mxu0 0.0
    %99 = vmatpush1.msra.mxu0 0.0
    %100 = vmatprep.subr.mxu0 0.0
    %101 = vmatpush1.msra.mxu0 0.0
    %102 = vmatprep.subr.mxu0 0.0
    %103 = vmatpush1.msra.mxu0 0.0
    %104 = vmatprep.subr.mxu0 0.0
    %105 = vmatpush1.msra.mxu0 0.0
    %106 = vmatprep.subr.mxu0 0.0
    %107 = vmatpush1.msra.mxu0 0.0
    %108 = vmatprep.subr.mxu0 0.0
    %109 = vmatpush1.msra.mxu0 0.0
    %110 = vmatprep.subr.mxu0 0.0
    %111 = vmatpush1.msra.mxu0 0.0
    %112 = vmatprep.subr.mxu0 0.0
    %113 = vmatpush1.msra.mxu0 0.0
    %114 = vmatprep.subr.mxu0 0.0
    %115 = vmatpush1.msra.mxu0 0.0
    %116 = vmatprep.subr.mxu0 0.0
    %117 = vmatpush1.msra.mxu0 0.0
    %118 = vmatprep.subr.mxu0 0.0
    %119 = vmatpush1.msra.mxu0 0.0
    %120 = vmatprep.subr.mxu0 0.0
    %121 = vmatpush1.msra.mxu0 0.0
    %122 = vmatprep.subr.mxu0 0.0
    %123 = vmatpush1.msra.mxu0 0.0
    %124 = vmatprep.subr.mxu0 0.0
    %125 = vmatpush1.msra.mxu0 0.0
    %126 = vmatprep.subr.mxu0 0.0
    %127 = vmatpush1.msra.mxu0 0.0
    %128 = vmatprep.subr.mxu0 0.0
    %129 = vmatpush1.msra.mxu0 0.0
    %130 = vmatprep.subr.mxu0 0.0
    %131 = vmatpush1.msra.mxu0 0.0
    %132 = vmatprep.subr.mxu0 0.0
    %133 = vmatpush1.msra.mxu0 0.0
    %134 = vmatprep.subr.mxu0 0.0
    %135 = vmatpush1.msra.mxu0 0.0
    %136 = vmatprep.subr.mxu0 0.0
    %137 = vmatpush1.msra.mxu0 0.0
    %138 = vmatprep.subr.mxu0 0.0
    %139 = vmatpush1.msra.mxu0 0.0
    %140 = vmatprep.subr.mxu0 0.0
    %141 = vmatpush1.msra.mxu0 0.0
    %142 = vmatprep.subr.mxu0 0.0
    %143 = vmatpush1.msra.mxu0 0.0
    %144 = vmatprep.subr.mxu0 0.0
    %145 = vmatpush1.msra.mxu0 0.0
    %146 = vmatprep.mubr.f32.mxu0 0.0
    %147 = vmatmul.mubr.f32.gmra.mrb[0].mxu0 %v77
    %v148 = vpop.f32.mrb[0].mxu0
    %v149 = vadd.f32 0.0, %v148
    %v150 = vpop.f32.mrb[0].mxu0
    %151 = vmatprep.mubr.f32.mxu0 0.0
    %152 = vmatmul.mubr.f32.gmra.mrb[0].mxu0 %v80
    %v153 = vpop.f32.mrb[0].mxu0
    %v154 = vadd.f32 0.0, %v153
    %v155 = vpop.f32.mrb[0].mxu0
    %156 = vdwg.mxu0
    %v157 = vld [vmem:[#allocation7] sm:$0xff]
    %v158 = vld [vmem:[#allocation7 + $0x8] sm:$0xff]
    %v159 = vld [vmem:[#allocation7 + $0x10] sm:$0xff]
    %v160 = vld [vmem:[#allocation7 + $0x18] sm:$0xff]
    %v161 = vld [vmem:[%s4] sm:$0x1]
    %v163 = vlaneseq
    %v164 = vshrl.u32 %v163, 7
    %v165 = vsub.s32 0, %v164
    %v166 = vrot.slane %v161, %v165
    %v169 = vsel %vm75, %v70, 0
    %171 = vmatprep.subr.mxu0 0.0
    %172 = vmatpush1.msra.mxu0 %v157
    %173 = vmatprep.subr.mxu0 0.0
    %174 = vmatpush1.msra.mxu0 %v158
    %175 = vmatprep.subr.mxu0 0.0
    %176 = vmatpush1.msra.mxu0 %v159
    %177 = vmatprep.subr.mxu0 0.0
    %178 = vmatpush1.msra.mxu0 %v160
    %179 = vmatprep.subr.mxu0 0.0
    %180 = vmatpush1.msra.mxu0 0.0
    %181 = vmatprep.subr.mxu0 0.0
    %182 = vmatpush1.msra.mxu0 0.0
    %183 = vmatprep.subr.mxu0 0.0
    %184 = vmatpush1.msra.mxu0 0.0
    %185 = vmatprep.subr.mxu0 0.0
    %186 = vmatpush1.msra.mxu0 0.0
    %187 = vmatprep.subr.mxu0 0.0
    %188 = vmatpush1.msra.mxu0 0.0
    %189 = vmatprep.subr.mxu0 0.0
    %190 = vmatpush1.msra.mxu0 0.0
    %191 = vmatprep.subr.mxu0 0.0
    %192 = vmatpush1.msra.mxu0 0.0
    %193 = vmatprep.subr.mxu0 0.0
    %194 = vmatpush1.msra.mxu0 0.0
    %195 = vmatprep.subr.mxu0 0.0
    %196 = vmatpush1.msra.mxu0 0.0
    %197 = vmatprep.subr.mxu0 0.0
    %198 = vmatpush1.msra.mxu0 0.0
    %199 = vmatprep.subr.mxu0 0.0
    %200 = vmatpush1.msra.mxu0 0.0
    %201 = vmatprep.subr.mxu0 0.0
    %202 = vmatpush1.msra.mxu0 0.0
    %203 = vmatprep.subr.mxu0 0.0
    %204 = vmatpush1.msra.mxu0 0.0
    %205 = vmatprep.subr.mxu0 0.0
    %206 = vmatpush1.msra.mxu0 0.0
    %207 = vmatprep.subr.mxu0 0.0
    %208 = vmatpush1.msra.mxu0 0.0
    %209 = vmatprep.subr.mxu0 0.0
    %210 = vmatpush1.msra.mxu0 0.0
    %211 = vmatprep.subr.mxu0 0.0
    %212 = vmatpush1.msra.mxu0 0.0
    %213 = vmatprep.subr.mxu0 0.0
    %214 = vmatpush1.msra.mxu0 0.0
    %215 = vmatprep.subr.mxu0 0.0
    %216 = vmatpush1.msra.mxu0 0.0
    %217 = vmatprep.subr.mxu0 0.0
    %218 = vmatpush1.msra.mxu0 0.0
    %219 = vmatprep.subr.mxu0 0.0
    %220 = vmatpush1.msra.mxu0 0.0
    %221 = vmatprep.subr.mxu0 0.0
    %222 = vmatpush1.msra.mxu0 0.0
    %223 = vmatprep.subr.mxu0 0.0
    %224 = vmatpush1.msra.mxu0 0.0
    %225 = vmatprep.subr.mxu0 0.0
    %226 = vmatpush1.msra.mxu0 0.0
    %227 = vmatprep.subr.mxu0 0.0
    %228 = vmatpush1.msra.mxu0 0.0
    %229 = vmatprep.subr.mxu0 0.0
    %230 = vmatpush1.msra.mxu0 0.0
    %231 = vmatprep.subr.mxu0 0.0
    %232 = vmatpush1.msra.mxu0 0.0
    %233 = vmatprep.subr.mxu0 0.0
    %234 = vmatpush1.msra.mxu0 0.0
    %235 = vmatprep.mubr.f32.mxu0 0.0
    %236 = vmatmul.mubr.f32.gmra.mrb[0].mxu0 %v169
    %v237 = vpop.f32.mrb[0].mxu0
    %v238 = vadd.f32 %v166, %v237
    %v239 = vpop.f32.mrb[0].mxu0
    %240 = vdwg.mxu0
    %v243 = vunpack.c.l.s4 1966171168
    %v244 = vunpack.c.0.s8 %v243
    %v245 = vlaneseq
    %v246 = vshrl.u32 %v245, 7
    %v247 = vsub.s32 %v244, %v246
    %v248 = vrot.slane %v238, %v247
    %v249 = vcombine.high %v248, %v248
    %v251 = vunpack.c.l.s4 1966171168
    %v252 = vunpack.c.0.s8 %v251
    %v253 = vlaneseq
    %v254 = vshrl.u32 %v253, 7
    %v255 = vsub.s32 %v252, %v254
    %v256 = vrot.slane %v248, %v255
    %v258 = vunpack.c.l.s4 1966171168
    %v259 = vunpack.c.0.s8 %v258
    %v260 = vlaneseq
    %v261 = vshrl.u32 %v260, 7
    %v262 = vsub.s32 %v259, %v261
    %v263 = vrot.slane %v249, %v262
    %v264 = vlaneseq
    %v265 = vshrl.u32 %v264, 7
    %v266 = vsub.s32 0, %v265
    %v267 = vrot.slane %v256, %v266
    %v268 = vlaneseq
    %v269 = vshrl.u32 %v268, 7
    %v270 = vsub.s32 0, %v269
    %v271 = vrot.slane %v263, %v270
    %v274 = vadd.f32 %v149, %v267
    %v275 = vadd.f32 %v154, %v271
    %v276 = vmax.f32 %v274, 0.0
    %v277 = vmax.f32 %v275, 0.0
    %v278 = vld [vmem:[%s5] sm:$0x1]
    %v280 = vlaneseq
    %v281 = vshrl.u32 %v280, 7
    %v282 = vsub.s32 0, %v281
    %v283 = vrot.slane %v278, %v282
    %v285 = vmul.f32 %v276, %v283
    %v286 = vmul.f32 %v277, %v283
    %v287 = vsel %vm75, %v285, 0.0
    %288 = vadd.xlane.f32.xlu0 %v287
    %v289 = vpop.xlane.xlu0 %288
    %v290 = vsel %vm75, %v286, 0.0
    %291 = vadd.xlane.f32.xlu0 %v290
    %v292 = vpop.xlane.xlu0 %291
    %v295 = vlaneseq
    %v296 = vand.u32 %v295, 127
    %v297 = vlaneseq
    %v298 = vshrl.u32 %v297, 7
    %v299 = vsub.s32 %v296, %v298
    %v300 = vrot.slane %v289, %v299
    %v301 = vlaneseq
    %v302 = vshrl.u32 %v301, 7
    %v303 = vsub.s32 %v296, %v302
    %v304 = vrot.slane %v292, %v303
    %vm305 = vcmask 1041409
    %v306 = vsel %vm305, %v304, %v300
    %vm308 = vcmask 58368
    %v309 = vsel %vm308, %v306, -inf
    %310 = vmax.xlane.f32.xlu0 %v309
    %v311 = vpop.xlane.xlu0 %310
    %v313 = vlaneseq
    %v314 = vshrl.u32 %v313, 7
    %v315 = vsub.s32 0, %v314
    %v316 = vrot.slane %v311, %v315
    %v317 = vlaneseq
    %v318 = vshrl.u32 %v317, 7
    %v319 = vsub.s32 1, %v318
    %v320 = vrot.slane %v311, %v319
    %v323 = vsub.f32 %v289, %v316
    %v324 = vsub.f32 %v292, %v320
    %v325 = vmul.f32 %v323, 1.442695
    %v326 = vpow.pop %v325
    %v327 = vmul.f32 %v324, 1.442695
    %v328 = vpow.pop %v327
    %331 = vset.pattern.permute.xlu0 0
    %332 = vperm.xlu0 %331, %v326
    %v333 = vpop.permute.xlu0 %332
    %334 = vset.pattern.permute.xlu0 0
    %335 = vperm.xlu0 %334, %v328
    %v336 = vpop.permute.xlu0 %335
    %v337 = vlaneseq
    %v338 = vshrl.u32 %v337, 7
    %v339 = vsub.s32 %v296, %v338
    %v340 = vrot.slane %v333, %v339
    %v341 = vlaneseq
    %v342 = vshrl.u32 %v341, 7
    %v343 = vsub.s32 %v296, %v342
    %v344 = vrot.slane %v336, %v343
    %v345 = vsel %vm305, %v344, %v340
    %v347 = vsel %vm308, %v345, 0.0
    %348 = vadd.xlane.f32.xlu0 %v347
    %v349 = vpop.xlane.xlu0 %348
    %v350 = vrcp.pop %v349
    %v352 = vlaneseq
    %v353 = vshrl.u32 %v352, 7
    %v354 = vsub.s32 0, %v353
    %v355 = vrot.slane %v350, %v354
    %v356 = vlaneseq
    %v357 = vshrl.u32 %v356, 7
    %v358 = vsub.s32 1, %v357
    %v359 = vrot.slane %v350, %v358
    %v362 = vmul.f32 %v326, %v355
    %v363 = vmul.f32 %v328, %v359
    %365 = vset.pattern.permute.xlu0 0
    %366 = vperm.xlu0 %365, %v362
    %v367 = vpop.permute.xlu0 %366
    %v368 = vlaneseq
    %v369 = vshrl.u32 %v368, 7
    %v370 = vsub.s32 %v296, %v369
    %v371 = vrot.slane %v367, %v370
    %vm372 = vcmask 64512
    %v373 = vsel %vm372, %v371, 0
    %375 = vmatprep.subr.mxu0 0.0
    %376 = vmatpush1.msra.mxu0 %v68
    %377 = vmatprep.subr.mxu0 0.0
    %378 = vmatpush1.msra.mxu0 0.0
    %379 = vmatprep.subr.mxu0 0.0
    %380 = vmatpush1.msra.mxu0 0.0
    %381 = vmatprep.subr.mxu0 0.0
    %382 = vmatpush1.msra.mxu0 0.0
    %383 = vmatprep.subr.mxu0 0.0
    %384 = vmatpush1.msra.mxu0 0.0
    %385 = vmatprep.subr.mxu0 0.0
    %386 = vmatpush1.msra.mxu0 0.0
    %387 = vmatprep.subr.mxu0 0.0
    %388 = vmatpush1.msra.mxu0 0.0
    %389 = vmatprep.subr.mxu0 0.0
    %390 = vmatpush1.msra.mxu0 0.0
    %391 = vmatprep.subr.mxu0 0.0
    %392 = vmatpush1.msra.mxu0 0.0
    %393 = vmatprep.subr.mxu0 0.0
    %394 = vmatpush1.msra.mxu0 0.0
    %395 = vmatprep.subr.mxu0 0.0
    %396 = vmatpush1.msra.mxu0 0.0
    %397 = vmatprep.subr.mxu0 0.0
    %398 = vmatpush1.msra.mxu0 0.0
    %399 = vmatprep.subr.mxu0 0.0
    %400 = vmatpush1.msra.mxu0 0.0
    %401 = vmatprep.subr.mxu0 0.0
    %402 = vmatpush1.msra.mxu0 0.0
    %403 = vmatprep.subr.mxu0 0.0
    %404 = vmatpush1.msra.mxu0 0.0
    %405 = vmatprep.subr.mxu0 0.0
    %406 = vmatpush1.msra.mxu0 0.0
    %407 = vmatprep.subr.mxu0 0.0
    %408 = vmatpush1.msra.mxu0 0.0
    %409 = vmatprep.subr.mxu0 0.0
    %410 = vmatpush1.msra.mxu0 0.0
    %411 = vmatprep.subr.mxu0 0.0
    %412 = vmatpush1.msra.mxu0 0.0
    %413 = vmatprep.subr.mxu0 0.0
    %414 = vmatpush1.msra.mxu0 0.0
    %415 = vmatprep.subr.mxu0 0.0
    %416 = vmatpush1.msra.mxu0 0.0
    %417 = vmatprep.subr.mxu0 0.0
    %418 = vmatpush1.msra.mxu0 0.0
    %419 = vmatprep.subr.mxu0 0.0
    %420 = vmatpush1.msra.mxu0 0.0
    %421 = vmatprep.subr.mxu0 0.0
    %422 = vmatpush1.msra.mxu0 0.0
    %423 = vmatprep.subr.mxu0 0.0
    %424 = vmatpush1.msra.mxu0 0.0
    %425 = vmatprep.subr.mxu0 0.0
    %426 = vmatpush1.msra.mxu0 0.0
    %427 = vmatprep.subr.mxu0 0.0
    %428 = vmatpush1.msra.mxu0 0.0
    %429 = vmatprep.subr.mxu0 0.0
    %430 = vmatpush1.msra.mxu0 0.0
    %431 = vmatprep.subr.mxu0 0.0
    %432 = vmatpush1.msra.mxu0 0.0
    %433 = vmatprep.subr.mxu0 0.0
    %434 = vmatpush1.msra.mxu0 0.0
    %435 = vmatprep.subr.mxu0 0.0
    %436 = vmatpush1.msra.mxu0 0.0
    %437 = vmatprep.subr.mxu0 0.0
    %438 = vmatpush1.msra.mxu0 0.0
    %439 = vmatprep.mubr.f32.mxu0 0.0
    %440 = vmatmul.mubr.f32.gmra.mrb[0].mxu0 %v373
    %v441 = vpop.f32.mrb[0].mxu0
    %v442 = vadd.f32 0.0, %v441
    %v443 = vpop.f32.mrb[0].mxu0
    %444 = vdwg.mxu0
    %446 = vset.pattern.permute.xlu0 0
    %447 = vperm.xlu0 %446, %v363
    %v448 = vpop.permute.xlu0 %447
    %v449 = vlaneseq
    %v450 = vshrl.u32 %v449, 7
    %v451 = vsub.s32 %v296, %v450
    %v452 = vrot.slane %v448, %v451
    %v453 = vsel %vm372, %v452, 0
    %455 = vmatprep.subr.mxu0 0.0
    %456 = vmatpush1.msra.mxu0 %v69
    %457 = vmatprep.subr.mxu0 0.0
    %458 = vmatpush1.msra.mxu0 0.0
    %459 = vmatprep.subr.mxu0 0.0
    %460 = vmatpush1.msra.mxu0 0.0
    %461 = vmatprep.subr.mxu0 0.0
    %462 = vmatpush1.msra.mxu0 0.0
    %463 = vmatprep.subr.mxu0 0.0
    %464 = vmatpush1.msra.mxu0 0.0
    %465 = vmatprep.subr.mxu0 0.0
    %466 = vmatpush1.msra.mxu0 0.0
    %467 = vmatprep.subr.mxu0 0.0
    %468 = vmatpush1.msra.mxu0 0.0
    %469 = vmatprep.subr.mxu0 0.0
    %470 = vmatpush1.msra.mxu0 0.0
    %471 = vmatprep.subr.mxu0 0.0
    %472 = vmatpush1.msra.mxu0 0.0
    %473 = vmatprep.subr.mxu0 0.0
    %474 = vmatpush1.msra.mxu0 0.0
    %475 = vmatprep.subr.mxu0 0.0
    %476 = vmatpush1.msra.mxu0 0.0
    %477 = vmatprep.subr.mxu0 0.0
    %478 = vmatpush1.msra.mxu0 0.0
    %479 = vmatprep.subr.mxu0 0.0
    %480 = vmatpush1.msra.mxu0 0.0
    %481 = vmatprep.subr.mxu0 0.0
    %482 = vmatpush1.msra.mxu0 0.0
    %483 = vmatprep.subr.mxu0 0.0
    %484 = vmatpush1.msra.mxu0 0.0
    %485 = vmatprep.subr.mxu0 0.0
    %486 = vmatpush1.msra.mxu0 0.0
    %487 = vmatprep.subr.mxu0 0.0
    %488 = vmatpush1.msra.mxu0 0.0
    %489 = vmatprep.subr.mxu0 0.0
    %490 = vmatpush1.msra.mxu0 0.0
    %491 = vmatprep.subr.mxu0 0.0
    %492 = vmatpush1.msra.mxu0 0.0
    %493 = vmatprep.subr.mxu0 0.0
    %494 = vmatpush1.msra.mxu0 0.0
    %495 = vmatprep.subr.mxu0 0.0
    %496 = vmatpush1.msra.mxu0 0.0
    %497 = vmatprep.subr.mxu0 0.0
    %498 = vmatpush1.msra.mxu0 0.0
    %499 = vmatprep.subr.mxu0 0.0
    %500 = vmatpush1.msra.mxu0 0.0
    %501 = vmatprep.subr.mxu0 0.0
    %502 = vmatpush1.msra.mxu0 0.0
    %503 = vmatprep.subr.mxu0 0.0
    %504 = vmatpush1.msra.mxu0 0.0
    %505 = vmatprep.subr.mxu0 0.0
    %506 = vmatpush1.msra.mxu0 0.0
    %507 = vmatprep.subr.mxu0 0.0
    %508 = vmatpush1.msra.mxu0 0.0
    %509 = vmatprep.subr.mxu0 0.0
    %510 = vmatpush1.msra.mxu0 0.0
    %511 = vmatprep.subr.mxu0 0.0
    %512 = vmatpush1.msra.mxu0 0.0
    %513 = vmatprep.subr.mxu0 0.0
    %514 = vmatpush1.msra.mxu0 0.0
    %515 = vmatprep.subr.mxu0 0.0
    %516 = vmatpush1.msra.mxu0 0.0
    %517 = vmatprep.subr.mxu0 0.0
    %518 = vmatpush1.msra.mxu0 0.0
    %519 = vmatprep.mubr.f32.mxu0 0.0
    %520 = vmatmul.mubr.f32.gmra.mrb[0].mxu0 %v453
    %v521 = vpop.f32.mrb[0].mxu0
    %v522 = vadd.f32 0.0, %v521
    %v523 = vpop.f32.mrb[0].mxu0
    %524 = vdwg.mxu0
    %v527 = vrot.slane %v522, 7
    %v528 = vsel %vm305, %v527, %v442
    %vm530 = vcmask 254976
    %531 = vst.msk [vmem:[#allocation8] sm:$0x3] %vm530, %v528
    %v532 = vsel %vm305, %v452, %v371
    %534 = vst.msk [vmem:[#allocation9] sm:$0x3] %vm308, %v532
    // Predicated region
    $region38: #{tpu_custom_call.1} parent=1 // pred_check
      _
    $region39: #{tpu_custom_call.1} parent=1 // pred_check_branch
      %536 = sbr.rel (0) target = $region41
    $region40: #{tpu_custom_call.1} parent=1 // pred_region
      %s538 = ssub.s32 32, 32
      %539 = vsyncadd [#allocation4], %s538
      %s541 = sshll.u32 [#allocation8], 4
      %s542 = int_to_ptr.vmem [resolvable:$true] %s541
      %544 = dma.vmem_to_hbm [thread:$0]  %s542, 32, %s6, [#allocation4]
    $region41: #{tpu_custom_call.1} parent=1 // pred_fallthru
      _
    // Predicated region
    $region42: #{tpu_custom_call.1} parent=1 // pred_check
      _
    $region43: #{tpu_custom_call.1} parent=1 // pred_check_branch
      %546 = sbr.rel (0) target = $region45
    $region44: #{tpu_custom_call.1} parent=1 // pred_region
      %s548 = ssub.s32 32, 32
      %549 = vsyncadd [#allocation10], %s548
      %s551 = sshll.u32 [#allocation9], 4
      %s552 = int_to_ptr.vmem [resolvable:$true] %s551
      %554 = dma.vmem_to_hbm [thread:$0]  %s552, 32, %s7, [#allocation10]
    $region45: #{tpu_custom_call.1} parent=1 // pred_fallthru
      _
    // Predicated region
    $region46: #{tpu_custom_call.1} parent=1 // pred_check
      _
    $region47: #{tpu_custom_call.1} parent=1 // pred_check_branch
      %556 = sbr.rel (0) target = $region49
    $region48: #{tpu_custom_call.1} parent=1 // pred_region
      %557 = dma.done [#allocation4], 32
    $region49: #{tpu_custom_call.1} parent=1 // pred_fallthru
      _
    // Predicated region
    $region50: #{tpu_custom_call.1} parent=1 // pred_check
      _
    $region51: #{tpu_custom_call.1} parent=1 // pred_check_branch
      %559 = sbr.rel (0) target = $region53
    $region52: #{tpu_custom_call.1} parent=1 // pred_region
      %560 = dma.done [#allocation10], 32
    $region53: #{tpu_custom_call.1} parent=1 // pred_fallthru
      _
    %561 = vsyncpa [#allocation3], 1
    %562 = vsyncpa [#allocation6], 1
    %563 = vsyncpa [#allocation4], 1
    %564 = vsyncpa [#allocation10], 1

</llo_original>
